<compile_context>
chip_gen: v7x
topology: tpu7x:2x2x1
jax: 0.10.0
libtpu: 0.0.40
codegen_flags: <defaults>
</compile_context>

<pallas_src>
import jax
import jax.numpy as jnp
from jax.experimental import pallas as pl
from jax.experimental.pallas import tpu as pltpu

LANE = 128        # vreg lane width
SUBLANE = 8       # vreg sublane count (f32)
MIN_SPLIT = 256   # min rows per block worth splitting across TensorCores


def _round_up(x, m):
    return (x + m - 1) // m * m


def qnet_kernel(x_ref, w1_ref, b1_ref, w2_ref, b2_ref, out_ref):
    # Layer 1: Linear + ReLU. Matmul in the weights' dtype (bf16 default,
    # f32 optional), f32 accumulation on the MXU.
    x = x_ref[...].astype(w1_ref.dtype)
    h = jnp.dot(x, w1_ref[...], preferred_element_type=jnp.float32)
    # Bias + ReLU kept in f32 (v5e's VPU has no bf16 elementwise path).
    h = jnp.maximum(h + b1_ref[...], 0.0)
    # Layer 2: Linear (output lanes padded to 128 -> lane-dense store).
    y = jnp.dot(h.astype(w2_ref.dtype), w2_ref[...],
                preferred_element_type=jnp.float32)
    out_ref[...] = (y + b2_ref[...]).astype(out_ref.dtype)


def prepare_params(w1, b1, w2, b2, *, compute_dtype=jnp.bfloat16,
                   b2_pad_value=0.0):
    """One-time layout prep (hoisted out of the per-step call path).

    w1: (state_dim, hidden)  b1: (hidden,)
    w2: (hidden, n_actions)  b2: (n_actions,)
    Pads hidden and n_actions up to multiples of 128. Hidden padding is
    mathematically inert (ReLU(0*w+0)=0, padded w2 rows are zero); padded
    action columns carry `b2_pad_value` (set to a large negative, e.g. -1e9,
    if the consumer argmaxes over an untrimmed 128-lane output).
    """
    state_dim, hidden = w1.shape
    n_actions = w2.shape[1]
    hp = _round_up(hidden, LANE)      # 150 -> 256
    ap = _round_up(n_actions, LANE)   # 4   -> 128

    w1p = jnp.pad(w1.astype(compute_dtype), ((0, 0), (0, hp - hidden)))
    b1p = jnp.pad(b1.astype(jnp.float32), (0, hp - hidden)).reshape(1, hp)
    w2p = jnp.pad(w2.astype(compute_dtype),
                  ((0, hp - hidden), (0, ap - n_actions)))
    b2p = jnp.pad(b2.astype(jnp.float32), (0, ap - n_actions),
                  constant_values=float(b2_pad_value)).reshape(1, ap)
    return {"w1": w1p, "b1": b1p, "w2": w2p, "b2": b2p,
            "n_actions": n_actions}


def qnet_forward(x, params, *, block_batch=2048, out_dtype=jnp.float32,
                 trim_actions=True):
    """x: (B, state_dim) f32.

    Default (trim_actions=True, out_dtype=f32) returns (B, n_actions) f32,
    exactly ReLU(x@W1+b1)@W2+b2. With trim_actions=False the padded
    (B, 128)-lane output is returned directly (no extra HBM slice pass);
    padded columns hold b2_pad_value.
    """
    w1, b1, w2, b2 = params["w1"], params["b1"], params["w2"], params["b2"]
    n_actions = params["n_actions"]
    B, state_dim = x.shape
    hp = w1.shape[1]
    ap = w2.shape[1]

    # Batch tiling: sublane-aligned, large tile, and >= 2 blocks for
    # mid/large batches so v7x's two TensorCores both get work.
    bp = _round_up(max(B, SUBLANE), SUBLANE)
    tb = min(_round_up(block_batch, SUBLANE), bp)
    if bp >= 2 * MIN_SPLIT and tb >= bp:
        tb = _round_up(pl.cdiv(bp, 2), SUBLANE)
    bp = _round_up(bp, tb)
    if bp != B:
        x = jnp.pad(x, ((0, bp - B), (0, 0)))

    num_blocks = bp // tb
    out_shape = jax.ShapeDtypeStruct((bp, ap), out_dtype)

    if num_blocks == 1:
        # Gridless path: whole arrays resident in VMEM, no pipeline bookkeeping.
        vmem = pl.BlockSpec(memory_space=pltpu.MemorySpace.VMEM)
        out = pl.pallas_call(
            qnet_kernel,
            out_shape=out_shape,
            in_specs=[vmem, vmem, vmem, vmem, vmem],
            out_specs=vmem,
        )(x, w1, b1, w2, b2)
    else:
        # Batch-tiled path: stream x/out, keep weights/biases VMEM-resident
        # (constant index_map -> DMA'd once), batch axis parallel for v7x.
        out = pl.pallas_call(
            qnet_kernel,
            out_shape=out_shape,
            grid=(num_blocks,),
            in_specs=[
                pl.BlockSpec((tb, state_dim), lambda i: (i, 0)),
                pl.BlockSpec((state_dim, hp), lambda i: (0, 0)),
                pl.BlockSpec((1, hp), lambda i: (0, 0)),
                pl.BlockSpec((hp, ap), lambda i: (0, 0)),
                pl.BlockSpec((1, ap), lambda i: (0, 0)),
            ],
            out_specs=pl.BlockSpec((tb, ap), lambda i: (i, 0)),
            compiler_params=pltpu.CompilerParams(
                dimension_semantics=("parallel",),
            ),
        )(x, w1, b1, w2, b2)

    if bp != B:
        out = out[:B]
    if trim_actions:
        out = out[:, :n_actions]
    return out


def init_params(key, state_dim=64, hidden=150, n_actions=4):
    """Deterministic init mimicking nn.Linear's uniform(-1/sqrt(fan_in), +).
    Weights stored [in, out] (== PyTorch weight.T)."""
    k1, k2, k3, k4 = jax.random.split(key, 4)
    bound1 = 1.0 / (state_dim ** 0.5)
    bound2 = 1.0 / (hidden ** 0.5)
    w1 = jax.random.uniform(k1, (state_dim, hidden), jnp.float32, -bound1, bound1)
    b1 = jax.random.uniform(k2, (hidden,), jnp.float32, -bound1, bound1)
    w2 = jax.random.uniform(k3, (hidden, n_actions), jnp.float32, -bound2, bound2)
    b2 = jax.random.uniform(k4, (n_actions,), jnp.float32, -bound2, bound2)
    return w1, b1, w2, b2


if __name__ == "__main__":
    state_dim, hidden, n_actions = 64, 150, 4
    batch = 2

    key = jax.random.PRNGKey(0)
    kx, kp = jax.random.split(key)
    x = jax.random.normal(kx, (batch, state_dim), jnp.float32)
    w1, b1, w2, b2 = init_params(kp, state_dim, hidden, n_actions)

    # Pure-JAX reference (same math as the PyTorch module).
    ref = jnp.maximum(x @ w1 + b1, 0.0) @ w2 + b2

    # 1) f32 weights, trimmed f32 output: exact semantics of the original module.
    params_f32 = prepare_params(w1, b1, w2, b2, compute_dtype=jnp.float32)
    out = jax.block_until_ready(qnet_forward(x, params_f32))
    assert out.shape == (batch, n_actions)
    assert jnp.allclose(out, ref, atol=1e-5, rtol=1e-5)

    # 2) Default bf16-weight MXU fast path (all generations, incl. v5e);
    #    f32 accumulation + f32 bias/ReLU -> only input-rounding error.
    params_bf16 = prepare_params(w1, b1, w2, b2)  # compute_dtype=bf16 default
    out_bf16 = jax.block_until_ready(qnet_forward(x, params_bf16))
    assert out_bf16.shape == (batch, n_actions)
    assert jnp.allclose(out_bf16, ref, atol=5e-2, rtol=5e-2)

    # 3) Batch-tiled (grid) path, exact f32 numerics.
    big_batch = 1024
    xb = jax.random.normal(kx, (big_batch, state_dim), jnp.float32)
    refb = jnp.maximum(xb @ w1 + b1, 0.0) @ w2 + b2
    outb = jax.block_until_ready(qnet_forward(xb, params_f32))
    assert outb.shape == (big_batch, n_actions)
    assert jnp.allclose(outb, refb, atol=1e-5, rtol=1e-5)

    # 4) Memory-optimized grid path: bf16 weights, bf16 output, no action
    #    trim (128-lane output), padded actions masked with -1e9 so argmax
    #    over the raw output is safe.
    params_fast = prepare_params(w1, b1, w2, b2, b2_pad_value=-1e9)
    outb_fast = jax.block_until_ready(
        qnet_forward(xb, params_fast, out_dtype=jnp.bfloat16,
                     trim_actions=False))
    assert outb_fast.shape == (big_batch, LANE)
    assert jnp.allclose(outb_fast[:, :n_actions].astype(jnp.float32), refb,
                        atol=5e-2, rtol=5e-2)
    assert bool(jnp.all(outb_fast[:, n_actions:] < -1e8))

    print("KERNEL_OK")
</pallas_src>

<mosaic_0001>
module attributes {stable_mosaic.version = 11 : i64} {
  func.func @qnet_kernel(%arg0: memref<8x64xf32, #tpu.memory_space<vmem>>, %arg1: memref<64x256xf32, #tpu.memory_space<vmem>>, %arg2: memref<1x256xf32, #tpu.memory_space<vmem>>, %arg3: memref<256x128xf32, #tpu.memory_space<vmem>>, %arg4: memref<1x128xf32, #tpu.memory_space<vmem>>, %arg5: memref<8x128xf32, #tpu.memory_space<vmem>>) attributes {dimension_semantics = [], scalar_prefetch = 0 : i64, scratch_operands = 0 : i64, tpu.core_type = #tpu.core_type<tc>} {
    %c0 = arith.constant 0 : index
    %c0_0 = arith.constant 0 : index
    %0 = vector.load %arg0[%c0, %c0_0] : memref<8x64xf32, #tpu.memory_space<vmem>>, vector<8x64xf32>
    %c0_1 = arith.constant 0 : index
    %c0_2 = arith.constant 0 : index
    %1 = vector.load %arg1[%c0_1, %c0_2] : memref<64x256xf32, #tpu.memory_space<vmem>>, vector<64x256xf32>
    %cst = arith.constant dense<0.000000e+00> : vector<8x256xf32>
    %2 = tpu.matmul %0, %1, %cst {dimension_numbers = #tpu.dot_dimension_numbers<[1], [0], [0], [1], [0, 0, 1, 1], [], []>} : vector<8x64xf32>, vector<64x256xf32>, vector<8x256xf32> -> vector<8x256xf32>
    %c0_3 = arith.constant 0 : index
    %c0_4 = arith.constant 0 : index
    %3 = vector.load %arg2[%c0_3, %c0_4] : memref<1x256xf32, #tpu.memory_space<vmem>>, vector<1x256xf32>
    %4 = vector.broadcast %3 : vector<1x256xf32> to vector<8x256xf32>
    %5 = arith.addf %2, %4 : vector<8x256xf32>
    %cst_5 = arith.constant 0.000000e+00 : f32
    %6 = vector.broadcast %cst_5 : f32 to vector<8x256xf32>
    %7 = arith.maximumf %5, %6 : vector<8x256xf32>
    %c0_6 = arith.constant 0 : index
    %c0_7 = arith.constant 0 : index
    %8 = vector.load %arg3[%c0_6, %c0_7] : memref<256x128xf32, #tpu.memory_space<vmem>>, vector<256x128xf32>
    %cst_8 = arith.constant dense<0.000000e+00> : vector<8x128xf32>
    %9 = tpu.matmul %7, %8, %cst_8 {dimension_numbers = #tpu.dot_dimension_numbers<[1], [0], [0], [1], [0, 0, 1, 1], [], []>} : vector<8x256xf32>, vector<256x128xf32>, vector<8x128xf32> -> vector<8x128xf32>
    %c0_9 = arith.constant 0 : index
    %c0_10 = arith.constant 0 : index
    %10 = vector.load %arg4[%c0_9, %c0_10] : memref<1x128xf32, #tpu.memory_space<vmem>>, vector<1x128xf32>
    %11 = vector.broadcast %10 : vector<1x128xf32> to vector<8x128xf32>
    %12 = arith.addf %9, %11 : vector<8x128xf32>
    %c0_11 = arith.constant 0 : index
    %c0_12 = arith.constant 0 : index
    %13 = vector.load %arg5[%c0_11, %c0_12] : memref<8x128xf32, #tpu.memory_space<vmem>>, vector<8x128xf32>
    tpu.vector_store %arg5[%c0_11, %c0_12], %12 {strides = array<i32>} : memref<8x128xf32, #tpu.memory_space<vmem>>, vector<8x128xf32>,
    return
  }
}

</mosaic_0001>

<llo_original>
// kernel: tpu_custom_call.1
$region0: #{tpu_custom_call.1}
  #allocation0 [shape = 'u32[]', space=smem, size = 0x4, offset = 0x4, fixed_abs, tag = 'smem constant byte address 0x4 - core index']
  #allocation1 [shape = 'u32[144,128]{1,0:T(1,128)}', space=vmem, size = 0x12000, scoped, tag = 'internal scratch']
  %s0 = inlined_call_operand.hbm [shape: f32[8,64], index: 0, kind: input, shape index: {}]
  %s1 = inlined_call_operand.hbm [shape: f32[64,256], index: 1, kind: input, shape index: {}]
  %s2 = inlined_call_operand.vmem [shape: f32[1,256], index: 2, kind: input, shape index: {}]
  %s3 = inlined_call_operand.hbm [shape: f32[256,128], index: 3, kind: input, shape index: {}]
  %s4 = inlined_call_operand.vmem [shape: f32[1,128], index: 4, kind: input, shape index: {}]
  %s5 = inlined_call_operand.hbm [shape: f32[8,128], index: 5, kind: output, shape index: {}]
  %s6 = sld [smem:[#allocation0]]
  $region42: #{tpu_custom_call.1} parent=0
    _
  %s8 = ssub.s32 1, %s6
  %s9 = scalar_select 0, %s8, %s6
  $region1: #{tpu_custom_call.1} parent=0
    #allocation2 [shape = 'u8[4096]{0}', space=vmem, size = 0x1000, scoped, tag = 'input window, operand 0, single buffered']
    #allocation3 [shape = 's32[1]{0}', space=sflag, size = 0x4, scoped, tag = 'scoped memory for tpu_custom_call.1']
    #allocation4 [shape = 's32[1]{0}', space=sflag, size = 0x4, scoped, tag = 'scoped memory for tpu_custom_call.1']
    #allocation5 [shape = 'u8[65536]{0}', space=vmem, size = 0x10000, scoped, tag = 'input window, operand 1, single buffered']
    #allocation6 [shape = 's32[1]{0}', space=sflag, size = 0x4, scoped, tag = 'scoped memory for tpu_custom_call.1']
    #allocation7 [shape = 'u8[131072]{0}', space=vmem, size = 0x20000, scoped, tag = 'input window, operand 3, single buffered']
    #allocation8 [shape = 'u8[4096]{0}', space=vmem, size = 0x1000, scoped, tag = 'output window, operand 0, single buffered']
    %10 = vsyncpa [#allocation3], 0
    %11 = vsyncpa [#allocation6], 0
    %12 = vsyncpa [#allocation4], 0
    // Predicated region
    $region2: #{tpu_custom_call.1} parent=1 // pred_check
      _
    $region3: #{tpu_custom_call.1} parent=1 // pred_check_branch
      %14 = sbr.rel (0) target = $region5
    $region4: #{tpu_custom_call.1} parent=1 // pred_region
      %s16 = ssub.s32 128, 128
      %17 = vsyncadd [#allocation3], %s16
      %s19 = sshll.u32 [#allocation2], 4
      %s20 = int_to_ptr.vmem [resolvable:$true] %s19
      %22 = dma.hbm_to_vmem [thread:$0]  %s0, 128, %s20, [#allocation3]
    $region5: #{tpu_custom_call.1} parent=1 // pred_fallthru
      _
    // Predicated region
    $region6: #{tpu_custom_call.1} parent=1 // pred_check
      _
    $region7: #{tpu_custom_call.1} parent=1 // pred_check_branch
      %24 = sbr.rel (0) target = $region9
    $region8: #{tpu_custom_call.1} parent=1 // pred_region
      %s26 = ssub.s32 2048, 2048
      %27 = vsyncadd [#allocation6], %s26
      %s28 = sshll.u32 [#allocation5], 4
      %s29 = int_to_ptr.vmem [resolvable:$true] %s28
      %34 = dma.hbm_to_vmem [thread:$0]  %s1, 2048, %s29, [#allocation6], 256, 256, 16
    $region9: #{tpu_custom_call.1} parent=1 // pred_fallthru
      _
    // Predicated region
    $region10: #{tpu_custom_call.1} parent=1 // pred_check
      _
    $region11: #{tpu_custom_call.1} parent=1 // pred_check_branch
      %36 = sbr.rel (0) target = $region13
    $region12: #{tpu_custom_call.1} parent=1 // pred_region
      _
    $region13: #{tpu_custom_call.1} parent=1 // pred_fallthru
      _
    // Predicated region
    $region14: #{tpu_custom_call.1} parent=1 // pred_check
      _
    $region15: #{tpu_custom_call.1} parent=1 // pred_check_branch
      %38 = sbr.rel (0) target = $region17
    $region16: #{tpu_custom_call.1} parent=1 // pred_region
      %s40 = ssub.s32 4096, 4096
      %41 = vsyncadd [#allocation6], %s40
      %s42 = sshll.u32 [#allocation7], 4
      %s43 = int_to_ptr.vmem [resolvable:$true] %s42
      %48 = dma.hbm_to_vmem [thread:$0]  %s3, 4096, %s43, [#allocation6], 128, 128, 8
    $region17: #{tpu_custom_call.1} parent=1 // pred_fallthru
      _
    // Predicated region
    $region18: #{tpu_custom_call.1} parent=1 // pred_check
      _
    $region19: #{tpu_custom_call.1} parent=1 // pred_check_branch
      %50 = sbr.rel (0) target = $region21
    $region20: #{tpu_custom_call.1} parent=1 // pred_region
      _
    $region21: #{tpu_custom_call.1} parent=1 // pred_fallthru
      _
    // Predicated region
    $region22: #{tpu_custom_call.1} parent=1 // pred_check
      _
    $region23: #{tpu_custom_call.1} parent=1 // pred_check_branch
      %52 = sbr.rel (0) target = $region25
    $region24: #{tpu_custom_call.1} parent=1 // pred_region
      %53 = dma.done [#allocation3], 128
    $region25: #{tpu_custom_call.1} parent=1 // pred_fallthru
      _
    // Predicated region
    $region26: #{tpu_custom_call.1} parent=1 // pred_check
      _
    $region27: #{tpu_custom_call.1} parent=1 // pred_check_branch
      %55 = sbr.rel (0) target = $region29
    $region28: #{tpu_custom_call.1} parent=1 // pred_region
      %56 = dma.done [#allocation6], 2048
    $region29: #{tpu_custom_call.1} parent=1 // pred_fallthru
      _
    // Predicated region
    $region30: #{tpu_custom_call.1} parent=1 // pred_check
      _
    $region31: #{tpu_custom_call.1} parent=1 // pred_check_branch
      %58 = sbr.rel (0) target = $region33
    $region32: #{tpu_custom_call.1} parent=1 // pred_region
      %59 = dma.done [#allocation6], 4096
    $region33: #{tpu_custom_call.1} parent=1 // pred_fallthru
      _
    %v60 = vld [vmem:[#allocation2] sm:$0xff]
    %v61 = vld [vmem:[#allocation5] sm:$0xff]
    %v62 = vld [vmem:[#allocation5 + $0x8] sm:$0xff]
    %v63 = vld [vmem:[#allocation5 + $0x10] sm:$0xff]
    %v64 = vld [vmem:[#allocation5 + $0x18] sm:$0xff]
    %v65 = vld [vmem:[#allocation5 + $0x20] sm:$0xff]
    %v66 = vld [vmem:[#allocation5 + $0x28] sm:$0xff]
    %v67 = vld [vmem:[#allocation5 + $0x30] sm:$0xff]
    %v68 = vld [vmem:[#allocation5 + $0x38] sm:$0xff]
    %v69 = vld [vmem:[#allocation5 + $0x40] sm:$0xff]
    %v70 = vld [vmem:[#allocation5 + $0x48] sm:$0xff]
    %v71 = vld [vmem:[#allocation5 + $0x50] sm:$0xff]
    %v72 = vld [vmem:[#allocation5 + $0x58] sm:$0xff]
    %v73 = vld [vmem:[#allocation5 + $0x60] sm:$0xff]
    %v74 = vld [vmem:[#allocation5 + $0x68] sm:$0xff]
    %v75 = vld [vmem:[#allocation5 + $0x70] sm:$0xff]
    %v76 = vld [vmem:[#allocation5 + $0x78] sm:$0xff]
    %v77 = vld [vmem:[%s2] sm:$0x3]
    %v79 = vlaneseq
    %v80 = vshrl.u32 %v79, 7
    %v81 = vsub.s32 0, %v80
    %v82 = vrot.slane %v77, %v81
    %v83 = vlaneseq
    %v84 = vshrl.u32 %v83, 7
    %v85 = vsub.s32 1, %v84
    %v86 = vrot.slane %v77, %v85
    %vm89 = vcmask 523264
    %v91 = vsel %vm89, %v60, 0
    %93 = vmatprep.subr.mxu0 %v62
    %94 = vmatpush1.msra.mxu0 %v61
    %95 = vmatprep.subr.mxu0 %v64
    %96 = vmatpush1.msra.mxu0 %v63
    %97 = vmatprep.subr.mxu0 %v66
    %98 = vmatpush1.msra.mxu0 %v65
    %99 = vmatprep.subr.mxu0 %v68
    %100 = vmatpush1.msra.mxu0 %v67
    %101 = vmatprep.subr.mxu0 %v70
    %102 = vmatpush1.msra.mxu0 %v69
    %103 = vmatprep.subr.mxu0 %v72
    %104 = vmatpush1.msra.mxu0 %v71
    %105 = vmatprep.subr.mxu0 %v74
    %106 = vmatpush1.msra.mxu0 %v73
    %107 = vmatprep.subr.mxu0 %v76
    %108 = vmatpush1.msra.mxu0 %v75
    %109 = vmatprep.subr.mxu0 0.0
    %110 = vmatpush1.msra.mxu0 0.0
    %111 = vmatprep.subr.mxu0 0.0
    %112 = vmatpush1.msra.mxu0 0.0
    %113 = vmatprep.subr.mxu0 0.0
    %114 = vmatpush1.msra.mxu0 0.0
    %115 = vmatprep.subr.mxu0 0.0
    %116 = vmatpush1.msra.mxu0 0.0
    %117 = vmatprep.subr.mxu0 0.0
    %118 = vmatpush1.msra.mxu0 0.0
    %119 = vmatprep.subr.mxu0 0.0
    %120 = vmatpush1.msra.mxu0 0.0
    %121 = vmatprep.subr.mxu0 0.0
    %122 = vmatpush1.msra.mxu0 0.0
    %123 = vmatprep.subr.mxu0 0.0
    %124 = vmatpush1.msra.mxu0 0.0
    %125 = vmatprep.subr.mxu0 0.0
    %126 = vmatpush1.msra.mxu0 0.0
    %127 = vmatprep.subr.mxu0 0.0
    %128 = vmatpush1.msra.mxu0 0.0
    %129 = vmatprep.subr.mxu0 0.0
    %130 = vmatpush1.msra.mxu0 0.0
    %131 = vmatprep.subr.mxu0 0.0
    %132 = vmatpush1.msra.mxu0 0.0
    %133 = vmatprep.subr.mxu0 0.0
    %134 = vmatpush1.msra.mxu0 0.0
    %135 = vmatprep.subr.mxu0 0.0
    %136 = vmatpush1.msra.mxu0 0.0
    %137 = vmatprep.subr.mxu0 0.0
    %138 = vmatpush1.msra.mxu0 0.0
    %139 = vmatprep.subr.mxu0 0.0
    %140 = vmatpush1.msra.mxu0 0.0
    %141 = vmatprep.subr.mxu0 0.0
    %142 = vmatpush1.msra.mxu0 0.0
    %143 = vmatprep.subr.mxu0 0.0
    %144 = vmatpush1.msra.mxu0 0.0
    %145 = vmatprep.subr.mxu0 0.0
    %146 = vmatpush1.msra.mxu0 0.0
    %147 = vmatprep.subr.mxu0 0.0
    %148 = vmatpush1.msra.mxu0 0.0
    %149 = vmatprep.subr.mxu0 0.0
    %150 = vmatpush1.msra.mxu0 0.0
    %151 = vmatprep.subr.mxu0 0.0
    %152 = vmatpush1.msra.mxu0 0.0
    %153 = vmatprep.subr.mxu0 0.0
    %154 = vmatpush1.msra.mxu0 0.0
    %155 = vmatprep.subr.mxu0 0.0
    %156 = vmatpush1.msra.mxu0 0.0
    %157 = vmatprep.mubr.f32.mxu0 0.0
    %158 = vmatmul.mubr.f32.gmra.mrb[0].mxu0 %v91
    %v159 = vpop.f32.mrb[0].mxu0
    %v160 = vadd.f32 %v82, %v159
    %v161 = vpop.f32.mrb[0].mxu0
    %v162 = vadd.f32 %v86, %v161
    %163 = vdwg.mxu0
    %v164 = vmax.f32 %v160, 0.0
    %v165 = vmax.f32 %v162, 0.0
    %v166 = vld [vmem:[#allocation7] sm:$0xff]
    %v167 = vld [vmem:[#allocation7 + $0x8] sm:$0xff]
    %v168 = vld [vmem:[#allocation7 + $0x10] sm:$0xff]
    %v169 = vld [vmem:[#allocation7 + $0x18] sm:$0xff]
    %v170 = vld [vmem:[#allocation7 + $0x20] sm:$0xff]
    %v171 = vld [vmem:[#allocation7 + $0x28] sm:$0xff]
    %v172 = vld [vmem:[#allocation7 + $0x30] sm:$0xff]
    %v173 = vld [vmem:[#allocation7 + $0x38] sm:$0xff]
    %v174 = vld [vmem:[#allocation7 + $0x40] sm:$0xff]
    %v175 = vld [vmem:[#allocation7 + $0x48] sm:$0xff]
    %v176 = vld [vmem:[#allocation7 + $0x50] sm:$0xff]
    %v177 = vld [vmem:[#allocation7 + $0x58] sm:$0xff]
    %v178 = vld [vmem:[#allocation7 + $0x60] sm:$0xff]
    %v179 = vld [vmem:[#allocation7 + $0x68] sm:$0xff]
    %v180 = vld [vmem:[#allocation7 + $0x70] sm:$0xff]
    %v181 = vld [vmem:[#allocation7 + $0x78] sm:$0xff]
    %v182 = vld [vmem:[#allocation7 + $0x80] sm:$0xff]
    %v183 = vld [vmem:[#allocation7 + $0x88] sm:$0xff]
    %v184 = vld [vmem:[#allocation7 + $0x90] sm:$0xff]
    %v185 = vld [vmem:[#allocation7 + $0x98] sm:$0xff]
    %v186 = vld [vmem:[#allocation7 + $0xa0] sm:$0xff]
    %v187 = vld [vmem:[#allocation7 + $0xa8] sm:$0xff]
    %v188 = vld [vmem:[#allocation7 + $0xb0] sm:$0xff]
    %v189 = vld [vmem:[#allocation7 + $0xb8] sm:$0xff]
    %v190 = vld [vmem:[#allocation7 + $0xc0] sm:$0xff]
    %v191 = vld [vmem:[#allocation7 + $0xc8] sm:$0xff]
    %v192 = vld [vmem:[#allocation7 + $0xd0] sm:$0xff]
    %v193 = vld [vmem:[#allocation7 + $0xd8] sm:$0xff]
    %v194 = vld [vmem:[#allocation7 + $0xe0] sm:$0xff]
    %v195 = vld [vmem:[#allocation7 + $0xe8] sm:$0xff]
    %v196 = vld [vmem:[#allocation7 + $0xf0] sm:$0xff]
    %v197 = vld [vmem:[#allocation7 + $0xf8] sm:$0xff]
    %v198 = vld [vmem:[%s4] sm:$0x1]
    %v200 = vlaneseq
    %v201 = vshrl.u32 %v200, 7
    %v202 = vsub.s32 0, %v201
    %v203 = vrot.slane %v198, %v202
    %205 = vmatprep.subr.mxu0 0.0
    %206 = vmatpush1.msra.mxu0 %v166
    %207 = vmatprep.subr.mxu0 0.0
    %208 = vmatpush1.msra.mxu0 %v167
    %209 = vmatprep.subr.mxu0 0.0
    %210 = vmatpush1.msra.mxu0 %v168
    %211 = vmatprep.subr.mxu0 0.0
    %212 = vmatpush1.msra.mxu0 %v169
    %213 = vmatprep.subr.mxu0 0.0
    %214 = vmatpush1.msra.mxu0 %v170
    %215 = vmatprep.subr.mxu0 0.0
    %216 = vmatpush1.msra.mxu0 %v171
    %217 = vmatprep.subr.mxu0 0.0
    %218 = vmatpush1.msra.mxu0 %v172
    %219 = vmatprep.subr.mxu0 0.0
    %220 = vmatpush1.msra.mxu0 %v173
    %221 = vmatprep.subr.mxu0 0.0
    %222 = vmatpush1.msra.mxu0 %v174
    %223 = vmatprep.subr.mxu0 0.0
    %224 = vmatpush1.msra.mxu0 %v175
    %225 = vmatprep.subr.mxu0 0.0
    %226 = vmatpush1.msra.mxu0 %v176
    %227 = vmatprep.subr.mxu0 0.0
    %228 = vmatpush1.msra.mxu0 %v177
    %229 = vmatprep.subr.mxu0 0.0
    %230 = vmatpush1.msra.mxu0 %v178
    %231 = vmatprep.subr.mxu0 0.0
    %232 = vmatpush1.msra.mxu0 %v179
    %233 = vmatprep.subr.mxu0 0.0
    %234 = vmatpush1.msra.mxu0 %v180
    %235 = vmatprep.subr.mxu0 0.0
    %236 = vmatpush1.msra.mxu0 %v181
    %237 = vmatprep.subr.mxu0 0.0
    %238 = vmatpush1.msra.mxu0 %v182
    %239 = vmatprep.subr.mxu0 0.0
    %240 = vmatpush1.msra.mxu0 %v183
    %241 = vmatprep.subr.mxu0 0.0
    %242 = vmatpush1.msra.mxu0 %v184
    %243 = vmatprep.subr.mxu0 0.0
    %244 = vmatpush1.msra.mxu0 %v185
    %245 = vmatprep.subr.mxu0 0.0
    %246 = vmatpush1.msra.mxu0 %v186
    %247 = vmatprep.subr.mxu0 0.0
    %248 = vmatpush1.msra.mxu0 %v187
    %249 = vmatprep.subr.mxu0 0.0
    %250 = vmatpush1.msra.mxu0 %v188
    %251 = vmatprep.subr.mxu0 0.0
    %252 = vmatpush1.msra.mxu0 %v189
    %253 = vmatprep.subr.mxu0 0.0
    %254 = vmatpush1.msra.mxu0 %v190
    %255 = vmatprep.subr.mxu0 0.0
    %256 = vmatpush1.msra.mxu0 %v191
    %257 = vmatprep.subr.mxu0 0.0
    %258 = vmatpush1.msra.mxu0 %v192
    %259 = vmatprep.subr.mxu0 0.0
    %260 = vmatpush1.msra.mxu0 %v193
    %261 = vmatprep.subr.mxu0 0.0
    %262 = vmatpush1.msra.mxu0 %v194
    %263 = vmatprep.subr.mxu0 0.0
    %264 = vmatpush1.msra.mxu0 %v195
    %265 = vmatprep.subr.mxu0 0.0
    %266 = vmatpush1.msra.mxu0 %v196
    %267 = vmatprep.subr.mxu0 0.0
    %268 = vmatpush1.msra.mxu0 %v197
    %269 = vmatprep.mubr.f32.mxu0 %v165
    %270 = vmatmul.mubr.f32.gmra.mrb[0].mxu0 %v164
    %v271 = vpop.f32.mrb[0].mxu0
    %v272 = vadd.f32 %v203, %v271
    %v273 = vpop.f32.mrb[0].mxu0
    %274 = vdwg.mxu0
    %275 = vst [vmem:[#allocation8] sm:$0xff] %v272
    // Predicated region
    $region34: #{tpu_custom_call.1} parent=1 // pred_check
      _
    $region35: #{tpu_custom_call.1} parent=1 // pred_check_branch
      %277 = sbr.rel (0) target = $region37
    $region36: #{tpu_custom_call.1} parent=1 // pred_region
      %s279 = ssub.s32 128, 128
      %280 = vsyncadd [#allocation4], %s279
      %s282 = sshll.u32 [#allocation8], 4
      %s283 = int_to_ptr.vmem [resolvable:$true] %s282
      %285 = dma.vmem_to_hbm [thread:$0]  %s283, 128, %s5, [#allocation4]
    $region37: #{tpu_custom_call.1} parent=1 // pred_fallthru
      _
    // Predicated region
    $region38: #{tpu_custom_call.1} parent=1 // pred_check
      _
    $region39: #{tpu_custom_call.1} parent=1 // pred_check_branch
      %287 = sbr.rel (0) target = $region41
    $region40: #{tpu_custom_call.1} parent=1 // pred_region
      %288 = dma.done [#allocation4], 128
    $region41: #{tpu_custom_call.1} parent=1 // pred_fallthru
      _
    %289 = vsyncpa [#allocation3], 1
    %290 = vsyncpa [#allocation6], 1
    %291 = vsyncpa [#allocation4], 1

</llo_original>
